<compile_context>
chip_gen: v7x
topology: tpu7x:2x2x1
jax: 0.10.0
libtpu: 0.0.40
codegen_flags: <defaults>
</compile_context>

<pallas_src>
import functools

import jax
import jax.numpy as jnp
import numpy as np
from jax.experimental import pallas as pl
from jax.experimental.pallas import tpu as pltpu


def _dyrep_gru_kernel(x_ref, h_ref, wih_ref, whh_ref, bhh_ref, out_ref):
  """Node-on-lanes GRU memory update.

  x_ref   : (Kp, TN) bf16  fused message [mem[src], mem[dst], raw, t_enc, 1, 0..]
  h_ref   : (M,  TN) f32   memory[n_id]  (GRU hidden state)
  wih_ref : (3M, Kp) bf16  input weights, b_ih folded into the `1` column
  whh_ref : (3M, M)  f32   hidden weights
  bhh_ref : (3M, 1)  f32   hidden bias
  out_ref : (M,  TN) f32   updated memory (lane-dense stores)
  """
  f32 = jnp.float32
  h = h_ref[...]                                                     # (M, TN)

  # Single fused-K input projection (concat-then-matmul == one MXU pass).
  gi = jnp.dot(wih_ref[...], x_ref[...], preferred_element_type=f32)  # (3M, TN)
  # Hidden projection in f32 for recurrent-state fidelity.
  gh = jnp.dot(whh_ref[...], h, preferred_element_type=f32) + bhh_ref[...]

  # GRUCell, PyTorch gate order [r, z, n]; sublane slices (multiples of 8).
  M = h.shape[0]
  r = jax.nn.sigmoid(gi[0 * M:1 * M] + gh[0 * M:1 * M])
  z = jax.nn.sigmoid(gi[1 * M:2 * M] + gh[1 * M:2 * M])
  n = jnp.tanh(gi[2 * M:3 * M] + r * gh[2 * M:3 * M])
  out_ref[...] = (1.0 - z) * n + z * h


def _default_num_blocks():
  # v7x: exactly one big block per TensorCore (2); v5e/v6e: a single grid step.
  try:
    kind = jax.devices()[0].device_kind.lower()
    if "v7" in kind or "7x" in kind:
      return 2
  except Exception:
    pass
  return 1


@functools.partial(jax.jit, static_argnames=("num_blocks",))
def dyrep_memory_forward(
    n_id, memory, last_update,
    dst_s, t_s, raw_s,            # source message store (one stored event / node)
    dst_d, t_d, raw_d,            # destination message store
    time_w, time_b, w_ih_T, w_hh_T, b_ih, b_hh,
    num_blocks=None,
):
  """Returns (updated_memory[n_id], last_update[n_id])."""
  N = n_id.shape[0]
  M = memory.shape[1]
  R = raw_s.shape[1]
  T = time_w.shape[1]

  if num_blocks is None:
    num_blocks = _default_num_blocks()

  # ---- message-store lookup + LastAggregator select (index/scalar glue) ----
  ts = t_s[n_id].astype(jnp.int32)
  td = t_d[n_id].astype(jnp.int32)
  lu = last_update[n_id].astype(jnp.int32)
  take_s = ts >= td                                     # tie -> source store
  t_rel = (jnp.where(take_s, ts, td) - lu).astype(jnp.float32)[:, None]
  dst_sel = jnp.where(take_s, dst_s[n_id], dst_d[n_id])
  lu_out = jnp.maximum(ts, td)                          # scatter-max equivalent

  # TODO(synk): these per-node gathers could be fused into the kernel via
  # scalar prefetch + manual DMA from the HBM memory table; left as XLA glue.
  h = memory[n_id]                                      # (N, M) f32
  dst_mem = memory[dst_sel]                             # (N, M) f32
  raw_sel = jnp.where(take_s[:, None], raw_s[n_id], raw_d[n_id])

  # TimeEncoder (tiny EUP work) so the GRU input becomes one fused-K matmul.
  enc = jnp.cos(t_rel * time_w + time_b)                # (N, T)

  # ---- fused GRU input, node axis on lanes ---------------------------------
  K = 2 * M + R + T + 1                                 # +1: ones column for b_ih
  Kp = ((K + 127) // 128) * 128                         # pad K for MXU fill
  x = jnp.concatenate(
      [h, dst_mem, raw_sel, enc, jnp.ones((N, 1), jnp.float32)], axis=1)
  x = jnp.pad(x, ((0, 0), (0, Kp - K))).astype(jnp.bfloat16)

  rows = -(-N // num_blocks)
  block_lanes = max(128, ((rows + 127) // 128) * 128)
  Np = num_blocks * block_lanes
  pad = Np - N

  x_T = jnp.pad(x, ((0, pad), (0, 0))).T                # (Kp, Np) bf16
  h_T = jnp.pad(h, ((0, pad), (0, 0))).T                # (M,  Np) f32

  # ---- resident weight slabs ------------------------------------------------
  wih = jnp.zeros((3 * M, Kp), jnp.float32)
  wih = wih.at[:, :K - 1].set(w_ih_T.T)                 # [z_src, z_dst, raw, t_enc]
  wih = wih.at[:, K - 1].set(b_ih.reshape(-1))          # b_ih rides the `1` column
  wih = wih.astype(jnp.bfloat16)                        # (3M, Kp)
  whh = w_hh_T.T                                        # (3M, M) f32
  bhh = b_hh.reshape(3 * M, 1)                          # (3M, 1) f32

  lane_block = lambda d: pl.BlockSpec((d, block_lanes), lambda i: (0, i))
  resident = lambda a: pl.BlockSpec(a.shape, lambda i: (0, 0))

  mem_out_T = pl.pallas_call(
      _dyrep_gru_kernel,
      out_shape=jax.ShapeDtypeStruct((M, Np), jnp.float32),
      grid=(num_blocks,),
      in_specs=[lane_block(Kp), lane_block(M),
                resident(wih), resident(whh), resident(bhh)],
      out_specs=lane_block(M),
      input_output_aliases={1: 0},                      # reuse the h_T buffer
      compiler_params=pltpu.CompilerParams(
          dimension_semantics=("parallel",)),
  )(x_T, h_T, wih, whh, bhh)

  return mem_out_T[:, :N].T, lu_out


def _reference(n_id, memory, last_update, dst_s, t_s, raw_s, dst_d, t_d, raw_d,
               time_w, time_b, w_ih_T, w_hh_T, b_ih, b_hh):
  M = memory.shape[1]
  h = memory[n_id]
  lu = last_update[n_id][:, None].astype(jnp.float32)
  ts = t_s[n_id][:, None].astype(jnp.float32)
  td = t_d[n_id][:, None].astype(jnp.float32)
  enc_s = jnp.cos((ts - lu) * time_w + time_b)
  enc_d = jnp.cos((td - lu) * time_w + time_b)
  msg_s = jnp.concatenate([memory[n_id], memory[dst_s[n_id]], raw_s[n_id], enc_s], -1)
  msg_d = jnp.concatenate([memory[n_id], memory[dst_d[n_id]], raw_d[n_id], enc_d], -1)
  aggr = jnp.where(ts >= td, msg_s, msg_d)
  gi = aggr @ w_ih_T + b_ih
  gh = h @ w_hh_T + b_hh
  r = jax.nn.sigmoid(gi[:, :M] + gh[:, :M])
  z = jax.nn.sigmoid(gi[:, M:2 * M] + gh[:, M:2 * M])
  n = jnp.tanh(gi[:, 2 * M:] + r * gh[:, 2 * M:])
  mem = (1.0 - z) * n + z * h
  lu_out = jnp.maximum(t_s[n_id], t_d[n_id]).astype(jnp.int32)
  return mem, lu_out


if __name__ == "__main__":
  key = jax.random.PRNGKey(0)
  num_nodes, memory_dim, raw_msg_dim, time_dim = 1024, 32, 16, 8
  N = 512
  msg_dim = 2 * memory_dim + raw_msg_dim + time_dim     # IdentityMessage.out_channels

  ks = jax.random.split(key, 16)
  memory = jax.random.normal(ks[0], (num_nodes, memory_dim), jnp.float32)
  last_update = jax.random.randint(ks[1], (num_nodes,), 0, 100, jnp.int32)
  n_id = jax.random.permutation(ks[2], num_nodes)[:N]

  # Synthetic message stores: exactly one stored event per node in each store.
  dst_s = jax.random.randint(ks[3], (num_nodes,), 0, num_nodes, jnp.int32)
  t_s = jax.random.randint(ks[4], (num_nodes,), 50, 250, jnp.int32)
  raw_s = jax.random.normal(ks[5], (num_nodes, raw_msg_dim), jnp.float32)
  dst_d = jax.random.randint(ks[6], (num_nodes,), 0, num_nodes, jnp.int32)
  t_d = jax.random.randint(ks[7], (num_nodes,), 50, 250, jnp.int32)
  raw_d = jax.random.normal(ks[8], (num_nodes, raw_msg_dim), jnp.float32)

  # Parameters: TimeEncoder = Linear(1, time_dim); GRUCell(msg_dim, memory_dim).
  time_w = jax.random.normal(ks[9], (1, time_dim), jnp.float32) * 0.5
  time_b = jax.random.normal(ks[10], (1, time_dim), jnp.float32) * 0.5
  bound = 1.0 / np.sqrt(memory_dim)
  w_ih_T = jax.random.uniform(ks[11], (msg_dim, 3 * memory_dim), jnp.float32, -bound, bound)
  w_hh_T = jax.random.uniform(ks[12], (memory_dim, 3 * memory_dim), jnp.float32, -bound, bound)
  b_ih = jax.random.uniform(ks[13], (1, 3 * memory_dim), jnp.float32, -bound, bound)
  b_hh = jax.random.uniform(ks[14], (1, 3 * memory_dim), jnp.float32, -bound, bound)

  mem_out, lu_out = dyrep_memory_forward(
      n_id, memory, last_update, dst_s, t_s, raw_s, dst_d, t_d, raw_d,
      time_w, time_b, w_ih_T, w_hh_T, b_ih, b_hh,
      num_blocks=_default_num_blocks())
  jax.block_until_ready((mem_out, lu_out))

  mem_ref, lu_ref = _reference(
      n_id, memory, last_update, dst_s, t_s, raw_s, dst_d, t_d, raw_d,
      time_w, time_b, w_ih_T, w_hh_T, b_ih, b_hh)
  # Input projection runs with bf16 operands (f32 accumulation); tolerance set accordingly.
  np.testing.assert_allclose(np.asarray(mem_out), np.asarray(mem_ref),
                             rtol=2e-2, atol=2e-2)
  np.testing.assert_array_equal(np.asarray(lu_out), np.asarray(lu_ref))

  print("KERNEL_OK")
</pallas_src>

<mosaic_0001>
module attributes {stable_mosaic.version = 11 : i64} {
  func.func @_dyrep_gru_kernel(%arg0: i32, %arg1: memref<128x512xbf16, #tpu.memory_space<vmem>>, %arg2: memref<32x512xf32, #tpu.memory_space<vmem>>, %arg3: memref<96x128xbf16, #tpu.memory_space<vmem>>, %arg4: memref<96x32xf32, #tpu.memory_space<vmem>>, %arg5: memref<96x1xf32, #tpu.memory_space<vmem>>, %arg6: memref<32x512xf32, #tpu.memory_space<vmem>>) attributes {dimension_semantics = [#tpu.dimension_semantics<parallel>], iteration_bounds = array<i64: 1>, scalar_prefetch = 0 : i64, scratch_operands = 0 : i64, tpu.core_type = #tpu.core_type<tc>, window_params = [{transform_indices = @transform_0, window_bounds = array<i64: 128, 512>}, {transform_indices = @transform_1, window_bounds = array<i64: 32, 512>}, {pipeline_mode = #tpu.pipeline_mode<synchronous>, transform_indices = @transform_2, window_bounds = array<i64: 96, 128>}, {pipeline_mode = #tpu.pipeline_mode<synchronous>, transform_indices = @transform_3, window_bounds = array<i64: 96, 32>}, {pipeline_mode = #tpu.pipeline_mode<synchronous>, transform_indices = @transform_4, window_bounds = array<i64: 96, 1>}, {transform_indices = @transform_5, window_bounds = array<i64: 32, 512>}]} {
    %c0 = arith.constant 0 : index
    %c0_0 = arith.constant 0 : index
    %0 = vector.load %arg2[%c0, %c0_0] : memref<32x512xf32, #tpu.memory_space<vmem>>, vector<32x512xf32>
    %c0_1 = arith.constant 0 : index
    %c0_2 = arith.constant 0 : index
    %1 = vector.load %arg3[%c0_1, %c0_2] : memref<96x128xbf16, #tpu.memory_space<vmem>>, vector<96x128xbf16>
    %c0_3 = arith.constant 0 : index
    %c0_4 = arith.constant 0 : index
    %2 = vector.load %arg1[%c0_3, %c0_4] : memref<128x512xbf16, #tpu.memory_space<vmem>>, vector<128x512xbf16>
    %cst = arith.constant dense<0.000000e+00> : vector<96x512xf32>
    %3 = tpu.matmul %1, %2, %cst {dimension_numbers = #tpu.dot_dimension_numbers<[1], [0], [0], [1], [0, 0, 1, 1], [], []>} : vector<96x128xbf16>, vector<128x512xbf16>, vector<96x512xf32> -> vector<96x512xf32>
    %c0_5 = arith.constant 0 : index
    %c0_6 = arith.constant 0 : index
    %4 = vector.load %arg4[%c0_5, %c0_6] : memref<96x32xf32, #tpu.memory_space<vmem>>, vector<96x32xf32>
    %cst_7 = arith.constant dense<0.000000e+00> : vector<96x512xf32>
    %5 = tpu.matmul %4, %0, %cst_7 {dimension_numbers = #tpu.dot_dimension_numbers<[1], [0], [0], [1], [0, 0, 1, 1], [], []>} : vector<96x32xf32>, vector<32x512xf32>, vector<96x512xf32> -> vector<96x512xf32>
    %c0_8 = arith.constant 0 : index
    %c0_9 = arith.constant 0 : index
    %6 = vector.load %arg5[%c0_8, %c0_9] : memref<96x1xf32, #tpu.memory_space<vmem>>, vector<96x1xf32>
    %7 = vector.broadcast %6 : vector<96x1xf32> to vector<96x512xf32>
    %8 = arith.addf %5, %7 : vector<96x512xf32>
    %9 = vector.extract_strided_slice %3 {offsets = [0, 0], sizes = [32, 512], strides = [1, 1]} : vector<96x512xf32> to vector<32x512xf32>
    %10 = vector.extract_strided_slice %8 {offsets = [0, 0], sizes = [32, 512], strides = [1, 1]} : vector<96x512xf32> to vector<32x512xf32>
    %11 = arith.addf %9, %10 : vector<32x512xf32>
    %12 = arith.negf %11 : vector<32x512xf32>
    %13 = math.exp %12 : vector<32x512xf32>
    %cst_10 = arith.constant 1.000000e+00 : f32
    %14 = vector.broadcast %cst_10 : f32 to vector<32x512xf32>
    %15 = arith.addf %14, %13 : vector<32x512xf32>
    %16 = arith.divf %14, %15 : vector<32x512xf32>
    %17 = vector.extract_strided_slice %3 {offsets = [32, 0], sizes = [32, 512], strides = [1, 1]} : vector<96x512xf32> to vector<32x512xf32>
    %18 = vector.extract_strided_slice %8 {offsets = [32, 0], sizes = [32, 512], strides = [1, 1]} : vector<96x512xf32> to vector<32x512xf32>
    %19 = arith.addf %17, %18 : vector<32x512xf32>
    %20 = arith.negf %19 : vector<32x512xf32>
    %21 = math.exp %20 : vector<32x512xf32>
    %cst_11 = arith.constant 1.000000e+00 : f32
    %22 = vector.broadcast %cst_11 : f32 to vector<32x512xf32>
    %23 = arith.addf %22, %21 : vector<32x512xf32>
    %24 = arith.divf %22, %23 : vector<32x512xf32>
    %25 = vector.extract_strided_slice %3 {offsets = [64, 0], sizes = [32, 512], strides = [1, 1]} : vector<96x512xf32> to vector<32x512xf32>
    %26 = vector.extract_strided_slice %8 {offsets = [64, 0], sizes = [32, 512], strides = [1, 1]} : vector<96x512xf32> to vector<32x512xf32>
    %27 = arith.mulf %16, %26 : vector<32x512xf32>
    %28 = arith.addf %25, %27 : vector<32x512xf32>
    %29 = math.tanh %28 : vector<32x512xf32>
    %cst_12 = arith.constant 1.000000e+00 : f32
    %30 = vector.broadcast %cst_12 : f32 to vector<32x512xf32>
    %31 = arith.subf %30, %24 : vector<32x512xf32>
    %32 = arith.mulf %31, %29 : vector<32x512xf32>
    %33 = arith.mulf %24, %0 : vector<32x512xf32>
    %34 = arith.addf %32, %33 : vector<32x512xf32>
    %c0_13 = arith.constant 0 : index
    %c0_14 = arith.constant 0 : index
    %35 = vector.load %arg6[%c0_13, %c0_14] : memref<32x512xf32, #tpu.memory_space<vmem>>, vector<32x512xf32>
    tpu.vector_store %arg6[%c0_13, %c0_14], %34 {strides = array<i32>} : memref<32x512xf32, #tpu.memory_space<vmem>>, vector<32x512xf32>,
    return
  }
  func.func @transform_0(%arg0: i32) -> (i32, i32) {
    %c0_i32 = arith.constant 0 : i32
    %c0_i32_0 = arith.constant 0 : i32
    return %c0_i32, %arg0 : i32, i32
  }
  func.func @transform_1(%arg0: i32) -> (i32, i32) {
    %c0_i32 = arith.constant 0 : i32
    %c0_i32_0 = arith.constant 0 : i32
    return %c0_i32, %arg0 : i32, i32
  }
  func.func @transform_2(%arg0: i32) -> (i32, i32) {
    %c0_i32 = arith.constant 0 : i32
    %c0_i32_0 = arith.constant 0 : i32
    %c0_i32_1 = arith.constant 0 : i32
    return %c0_i32, %c0_i32_0 : i32, i32
  }
  func.func @transform_3(%arg0: i32) -> (i32, i32) {
    %c0_i32 = arith.constant 0 : i32
    %c0_i32_0 = arith.constant 0 : i32
    %c0_i32_1 = arith.constant 0 : i32
    return %c0_i32, %c0_i32_0 : i32, i32
  }
  func.func @transform_4(%arg0: i32) -> (i32, i32) {
    %c0_i32 = arith.constant 0 : i32
    %c0_i32_0 = arith.constant 0 : i32
    %c0_i32_1 = arith.constant 0 : i32
    return %c0_i32, %c0_i32_0 : i32, i32
  }
  func.func @transform_5(%arg0: i32) -> (i32, i32) {
    %c0_i32 = arith.constant 0 : i32
    %c0_i32_0 = arith.constant 0 : i32
    return %c0_i32, %arg0 : i32, i32
  }
}

</mosaic_0001>

<llo_original>
// kernel: dyrep_memory_forward.1
$region0: #{dyrep_memory_forward.1}
  #allocation0 [shape = 'u32[]', space=smem, size = 0x4, offset = 0x4, fixed_abs, tag = 'smem constant byte address 0x4 - core index']
  #allocation1 [shape = 'u32[144,128]{1,0:T(1,128)}', space=vmem, size = 0x12000, scoped, tag = 'internal scratch']
  %s0 = inlined_call_operand.vmem [shape: bf16[128,512], index: 0, kind: input, shape index: {}]
  %s1 = inlined_call_operand.vmem [shape: f32[32,512], index: 1, kind: input, shape index: {}, may-alias: {1,5}]
  %s2 = inlined_call_operand.vmem [shape: bf16[96,128], index: 2, kind: input, shape index: {}]
  %s3 = inlined_call_operand.vmem [shape: f32[96,32], index: 3, kind: input, shape index: {}]
  %s4 = inlined_call_operand.vmem [shape: f32[96,1], index: 4, kind: input, shape index: {}]
  %s5 = inlined_call_operand.vmem [shape: f32[32,512], index: 5, kind: output, shape index: {}, may-alias: {1,5}]
  %s6 = sld [smem:[#allocation0]]
  $region30: #{dyrep_memory_forward.1} parent=0
    _
  %s8 = ssub.s32 1, %s6
  %s9 = scalar_select 0, %s8, %s6
  // Predicated region
  $region2: #{dyrep_memory_forward.1} parent=0 // pred_check
    _
  $region3: #{dyrep_memory_forward.1} parent=0 // pred_check_branch
    %11 = sbr.rel (0) target = $region5
  $region4: #{dyrep_memory_forward.1} parent=0 // pred_region
    _
  $region5: #{dyrep_memory_forward.1} parent=0 // pred_fallthru
    _
  // Predicated region
  $region6: #{dyrep_memory_forward.1} parent=0 // pred_check
    _
  $region7: #{dyrep_memory_forward.1} parent=0 // pred_check_branch
    %13 = sbr.rel (0) target = $region9
  $region8: #{dyrep_memory_forward.1} parent=0 // pred_region
    _
  $region9: #{dyrep_memory_forward.1} parent=0 // pred_fallthru
    _
  // Predicated region
  $region10: #{dyrep_memory_forward.1} parent=0 // pred_check
    _
  $region11: #{dyrep_memory_forward.1} parent=0 // pred_check_branch
    %15 = sbr.rel (0) target = $region13
  $region12: #{dyrep_memory_forward.1} parent=0 // pred_region
    _
  $region13: #{dyrep_memory_forward.1} parent=0 // pred_fallthru
    _
  // Predicated region
  $region14: #{dyrep_memory_forward.1} parent=0 // pred_check
    _
  $region15: #{dyrep_memory_forward.1} parent=0 // pred_check_branch
    %17 = sbr.rel (0) target = $region17
  $region16: #{dyrep_memory_forward.1} parent=0 // pred_region
    _
  $region17: #{dyrep_memory_forward.1} parent=0 // pred_fallthru
    _
  // Predicated region
  $region18: #{dyrep_memory_forward.1} parent=0 // pred_check
    _
  $region19: #{dyrep_memory_forward.1} parent=0 // pred_check_branch
    %19 = sbr.rel (0) target = $region21
  $region20: #{dyrep_memory_forward.1} parent=0 // pred_region
    _
  $region21: #{dyrep_memory_forward.1} parent=0 // pred_fallthru
    _
  %v21 = vld [vmem:[%s1] sm:$0xff]
  %v22 = vld [vmem:[%s1 + $0x8] sm:$0xff]
  %v23 = vld [vmem:[%s1 + $0x10] sm:$0xff]
  %v24 = vld [vmem:[%s1 + $0x18] sm:$0xff]
  %v25 = vld [vmem:[%s1 + $0x20] sm:$0xff]
  %v26 = vld [vmem:[%s1 + $0x28] sm:$0xff]
  %v27 = vld [vmem:[%s1 + $0x30] sm:$0xff]
  %v28 = vld [vmem:[%s1 + $0x38] sm:$0xff]
  %v29 = vld [vmem:[%s1 + $0x40] sm:$0xff]
  %v30 = vld [vmem:[%s1 + $0x48] sm:$0xff]
  %v31 = vld [vmem:[%s1 + $0x50] sm:$0xff]
  %v32 = vld [vmem:[%s1 + $0x58] sm:$0xff]
  %v33 = vld [vmem:[%s1 + $0x60] sm:$0xff]
  %v34 = vld [vmem:[%s1 + $0x68] sm:$0xff]
  %v35 = vld [vmem:[%s1 + $0x70] sm:$0xff]
  %v36 = vld [vmem:[%s1 + $0x78] sm:$0xff]
  %v37 = vld [vmem:[%s2] sm:$0xf]
  %v38 = vld [vmem:[%s2 + $0x4] sm:$0xf]
  %v39 = vld [vmem:[%s2 + $0x8] sm:$0xf]
  %v40 = vld [vmem:[%s2 + $0xc] sm:$0xf]
  %v41 = vld [vmem:[%s2 + $0x10] sm:$0xf]
  %v42 = vld [vmem:[%s2 + $0x14] sm:$0xf]
  %v43 = vld [vmem:[%s2 + $0x18] sm:$0xf]
  %v44 = vld [vmem:[%s2 + $0x1c] sm:$0xf]
  %v45 = vld [vmem:[%s2 + $0x20] sm:$0xf]
  %v46 = vld [vmem:[%s2 + $0x24] sm:$0xf]
  %v47 = vld [vmem:[%s2 + $0x28] sm:$0xf]
  %v48 = vld [vmem:[%s2 + $0x2c] sm:$0xf]
  %v49 = vld [vmem:[%s0] sm:$0xff]
  %v50 = vld [vmem:[%s0 + $0x8] sm:$0xff]
  %v51 = vld [vmem:[%s0 + $0x10] sm:$0xff]
  %v52 = vld [vmem:[%s0 + $0x18] sm:$0xff]
  %v53 = vld [vmem:[%s0 + $0x20] sm:$0xff]
  %v54 = vld [vmem:[%s0 + $0x28] sm:$0xff]
  %v55 = vld [vmem:[%s0 + $0x30] sm:$0xff]
  %v56 = vld [vmem:[%s0 + $0x38] sm:$0xff]
  %v57 = vld [vmem:[%s0 + $0x40] sm:$0xff]
  %v58 = vld [vmem:[%s0 + $0x48] sm:$0xff]
  %v59 = vld [vmem:[%s0 + $0x50] sm:$0xff]
  %v60 = vld [vmem:[%s0 + $0x58] sm:$0xff]
  %v61 = vld [vmem:[%s0 + $0x60] sm:$0xff]
  %v62 = vld [vmem:[%s0 + $0x68] sm:$0xff]
  %v63 = vld [vmem:[%s0 + $0x70] sm:$0xff]
  %v64 = vld [vmem:[%s0 + $0x78] sm:$0xff]
  %v65 = vld [vmem:[%s0 + $0x80] sm:$0xff]
  %v66 = vld [vmem:[%s0 + $0x88] sm:$0xff]
  %v67 = vld [vmem:[%s0 + $0x90] sm:$0xff]
  %v68 = vld [vmem:[%s0 + $0x98] sm:$0xff]
  %v69 = vld [vmem:[%s0 + $0xa0] sm:$0xff]
  %v70 = vld [vmem:[%s0 + $0xa8] sm:$0xff]
  %v71 = vld [vmem:[%s0 + $0xb0] sm:$0xff]
  %v72 = vld [vmem:[%s0 + $0xb8] sm:$0xff]
  %v73 = vld [vmem:[%s0 + $0xc0] sm:$0xff]
  %v74 = vld [vmem:[%s0 + $0xc8] sm:$0xff]
  %v75 = vld [vmem:[%s0 + $0xd0] sm:$0xff]
  %v76 = vld [vmem:[%s0 + $0xd8] sm:$0xff]
  %v77 = vld [vmem:[%s0 + $0xe0] sm:$0xff]
  %v78 = vld [vmem:[%s0 + $0xe8] sm:$0xff]
  %v79 = vld [vmem:[%s0 + $0xf0] sm:$0xff]
  %v80 = vld [vmem:[%s0 + $0xf8] sm:$0xff]
  %v93 = vunpack.c.l.b16 %v37
  %v94 = vunpack.c.l.b16 %v38
  %v95 = vunpack.c.l.b16 %v39
  %v96 = vunpack.c.l.b16 %v40
  %v97 = vunpack.c.l.b16 %v41
  %v98 = vunpack.c.l.b16 %v42
  %v99 = vunpack.c.l.b16 %v43
  %v100 = vunpack.c.l.b16 %v44
  %v101 = vunpack.c.l.b16 %v45
  %v102 = vunpack.c.l.b16 %v46
  %v103 = vunpack.c.l.b16 %v47
  %v104 = vunpack.c.l.b16 %v48
  %v105 = vpack.c.b16 %v94, %v93
  %v106 = vpack.c.b16 %v96, %v95
  %v107 = vpack.c.b16 %v98, %v97
  %v108 = vpack.c.b16 %v100, %v99
  %v109 = vpack.c.b16 %v102, %v101
  %v110 = vpack.c.b16 %v104, %v103
  %v149 = vunpack.c.l.b16 %v49
  %v150 = vunpack.c.h.b16 %v49
  %v151 = vunpack.c.l.b16 %v50
  %v152 = vunpack.c.h.b16 %v50
  %v153 = vunpack.c.l.b16 %v51
  %v154 = vunpack.c.h.b16 %v51
  %v155 = vunpack.c.l.b16 %v52
  %v156 = vunpack.c.h.b16 %v52
  %v157 = vunpack.c.l.b16 %v53
  %v158 = vunpack.c.h.b16 %v53
  %v159 = vunpack.c.l.b16 %v54
  %v160 = vunpack.c.h.b16 %v54
  %v161 = vunpack.c.l.b16 %v55
  %v162 = vunpack.c.h.b16 %v55
  %v163 = vunpack.c.l.b16 %v56
  %v164 = vunpack.c.h.b16 %v56
  %v165 = vunpack.c.l.b16 %v57
  %v166 = vunpack.c.h.b16 %v57
  %v167 = vunpack.c.l.b16 %v58
  %v168 = vunpack.c.h.b16 %v58
  %v169 = vunpack.c.l.b16 %v59
  %v170 = vunpack.c.h.b16 %v59
  %v171 = vunpack.c.l.b16 %v60
  %v172 = vunpack.c.h.b16 %v60
  %v173 = vunpack.c.l.b16 %v61
  %v174 = vunpack.c.h.b16 %v61
  %v175 = vunpack.c.l.b16 %v62
  %v176 = vunpack.c.h.b16 %v62
  %v177 = vunpack.c.l.b16 %v63
  %v178 = vunpack.c.h.b16 %v63
  %v179 = vunpack.c.l.b16 %v64
  %v180 = vunpack.c.h.b16 %v64
  %v181 = vunpack.c.l.b16 %v65
  %v182 = vunpack.c.h.b16 %v65
  %v183 = vunpack.c.l.b16 %v66
  %v184 = vunpack.c.h.b16 %v66
  %v185 = vunpack.c.l.b16 %v67
  %v186 = vunpack.c.h.b16 %v67
  %v187 = vunpack.c.l.b16 %v68
  %v188 = vunpack.c.h.b16 %v68
  %v189 = vunpack.c.l.b16 %v69
  %v190 = vunpack.c.h.b16 %v69
  %v191 = vunpack.c.l.b16 %v70
  %v192 = vunpack.c.h.b16 %v70
  %v193 = vunpack.c.l.b16 %v71
  %v194 = vunpack.c.h.b16 %v71
  %v195 = vunpack.c.l.b16 %v72
  %v196 = vunpack.c.h.b16 %v72
  %v197 = vunpack.c.l.b16 %v73
  %v198 = vunpack.c.h.b16 %v73
  %v199 = vunpack.c.l.b16 %v74
  %v200 = vunpack.c.h.b16 %v74
  %v201 = vunpack.c.l.b16 %v75
  %v202 = vunpack.c.h.b16 %v75
  %v203 = vunpack.c.l.b16 %v76
  %v204 = vunpack.c.h.b16 %v76
  %v205 = vunpack.c.l.b16 %v77
  %v206 = vunpack.c.h.b16 %v77
  %v207 = vunpack.c.l.b16 %v78
  %v208 = vunpack.c.h.b16 %v78
  %v209 = vunpack.c.l.b16 %v79
  %v210 = vunpack.c.h.b16 %v79
  %v211 = vunpack.c.l.b16 %v80
  %v212 = vunpack.c.h.b16 %v80
  %v213 = vpack.c.b16 %v153, %v149
  %v214 = vpack.c.b16 %v154, %v150
  %v215 = vpack.c.b16 %v155, %v151
  %v216 = vpack.c.b16 %v156, %v152
  %v217 = vpack.c.b16 %v161, %v157
  %v218 = vpack.c.b16 %v162, %v158
  %v219 = vpack.c.b16 %v163, %v159
  %v220 = vpack.c.b16 %v164, %v160
  %v221 = vpack.c.b16 %v169, %v165
  %v222 = vpack.c.b16 %v170, %v166
  %v223 = vpack.c.b16 %v171, %v167
  %v224 = vpack.c.b16 %v172, %v168
  %v225 = vpack.c.b16 %v177, %v173
  %v226 = vpack.c.b16 %v178, %v174
  %v227 = vpack.c.b16 %v179, %v175
  %v228 = vpack.c.b16 %v180, %v176
  %v229 = vpack.c.b16 %v185, %v181
  %v230 = vpack.c.b16 %v186, %v182
  %v231 = vpack.c.b16 %v187, %v183
  %v232 = vpack.c.b16 %v188, %v184
  %v233 = vpack.c.b16 %v193, %v189
  %v234 = vpack.c.b16 %v194, %v190
  %v235 = vpack.c.b16 %v195, %v191
  %v236 = vpack.c.b16 %v196, %v192
  %v237 = vpack.c.b16 %v201, %v197
  %v238 = vpack.c.b16 %v202, %v198
  %v239 = vpack.c.b16 %v203, %v199
  %v240 = vpack.c.b16 %v204, %v200
  %v241 = vpack.c.b16 %v209, %v205
  %v242 = vpack.c.b16 %v210, %v206
  %v243 = vpack.c.b16 %v211, %v207
  %v244 = vpack.c.b16 %v212, %v208
  %277 = vmatprep.subr.bf16.mxu0 %v214
  %278 = vmatpush1.bf16.msra.mxu0 %v213
  %279 = vmatprep.subr.bf16.mxu0 %v218
  %280 = vmatpush1.bf16.msra.mxu0 %v217
  %281 = vmatprep.subr.bf16.mxu0 %v222
  %282 = vmatpush1.bf16.msra.mxu0 %v221
  %283 = vmatprep.subr.bf16.mxu0 %v226
  %284 = vmatpush1.bf16.msra.mxu0 %v225
  %285 = vmatprep.subr.bf16.mxu0 %v230
  %286 = vmatpush1.bf16.msra.mxu0 %v229
  %287 = vmatprep.subr.bf16.mxu0 %v234
  %288 = vmatpush1.bf16.msra.mxu0 %v233
  %289 = vmatprep.subr.bf16.mxu0 %v238
  %290 = vmatpush1.bf16.msra.mxu0 %v237
  %291 = vmatprep.subr.bf16.mxu0 %v242
  %292 = vmatpush1.bf16.msra.mxu0 %v241
  %293 = vmatprep.subr.bf16.mxu0 0
  %294 = vmatpush1.bf16.msra.mxu0 0
  %295 = vmatprep.subr.bf16.mxu0 0
  %296 = vmatpush1.bf16.msra.mxu0 0
  %297 = vmatprep.subr.bf16.mxu0 0
  %298 = vmatpush1.bf16.msra.mxu0 0
  %299 = vmatprep.subr.bf16.mxu0 0
  %300 = vmatpush1.bf16.msra.mxu0 0
  %301 = vmatprep.subr.bf16.mxu0 0
  %302 = vmatpush1.bf16.msra.mxu0 0
  %303 = vmatprep.subr.bf16.mxu0 0
  %304 = vmatpush1.bf16.msra.mxu0 0
  %305 = vmatprep.subr.bf16.mxu0 0
  %306 = vmatpush1.bf16.msra.mxu0 0
  %307 = vmatprep.subr.bf16.mxu0 0
  %308 = vmatpush1.bf16.msra.mxu0 0
  %309 = vmatprep.mubr.bf16.mxu0 0
  %310 = vmatmul.mubr.bf16.gmra.mrb[0].mxu0 %v105
  %v311 = vpop.f32.mrb[0].mxu0
  %v312 = vadd.f32 0.0, %v311
  %v313 = vpop.f32.mrb[0].mxu0
  %v314 = vadd.f32 0.0, %v313
  %v315 = vpop.f32.mrb[0].mxu0
  %v316 = vadd.f32 0.0, %v315
  %v317 = vpop.f32.mrb[0].mxu0
  %v318 = vadd.f32 0.0, %v317
  %319 = vmatprep.mubr.bf16.mxu0 0
  %320 = vmatmul.mubr.bf16.gmra.mrb[0].mxu0 %v106
  %v321 = vpop.f32.mrb[0].mxu0
  %v322 = vadd.f32 0.0, %v321
  %v323 = vpop.f32.mrb[0].mxu0
  %v324 = vadd.f32 0.0, %v323
  %v325 = vpop.f32.mrb[0].mxu0
  %v326 = vadd.f32 0.0, %v325
  %v327 = vpop.f32.mrb[0].mxu0
  %v328 = vadd.f32 0.0, %v327
  %329 = vmatprep.mubr.bf16.mxu0 0
  %330 = vmatmul.mubr.bf16.gmra.mrb[0].mxu0 %v107
  %v331 = vpop.f32.mrb[0].mxu0
  %v332 = vadd.f32 0.0, %v331
  %v333 = vpop.f32.mrb[0].mxu0
  %v334 = vadd.f32 0.0, %v333
  %v335 = vpop.f32.mrb[0].mxu0
  %v336 = vadd.f32 0.0, %v335
  %v337 = vpop.f32.mrb[0].mxu0
  %v338 = vadd.f32 0.0, %v337
  %339 = vmatprep.mubr.bf16.mxu0 0
  %340 = vmatmul.mubr.bf16.gmra.mrb[0].mxu0 %v108
  %v341 = vpop.f32.mrb[0].mxu0
  %v342 = vadd.f32 0.0, %v341
  %v343 = vpop.f32.mrb[0].mxu0
  %v344 = vadd.f32 0.0, %v343
  %v345 = vpop.f32.mrb[0].mxu0
  %v346 = vadd.f32 0.0, %v345
  %v347 = vpop.f32.mrb[0].mxu0
  %v348 = vadd.f32 0.0, %v347
  %349 = vmatprep.mubr.bf16.mxu0 0
  %350 = vmatmul.mubr.bf16.gmra.mrb[0].mxu0 %v109
  %v351 = vpop.f32.mrb[0].mxu0
  %v352 = vadd.f32 0.0, %v351
  %v353 = vpop.f32.mrb[0].mxu0
  %v354 = vadd.f32 0.0, %v353
  %v355 = vpop.f32.mrb[0].mxu0
  %v356 = vadd.f32 0.0, %v355
  %v357 = vpop.f32.mrb[0].mxu0
  %v358 = vadd.f32 0.0, %v357
  %359 = vmatprep.mubr.bf16.mxu0 0
  %360 = vmatmul.mubr.bf16.gmra.mrb[0].mxu0 %v110
  %v361 = vpop.f32.mrb[0].mxu0
  %v362 = vadd.f32 0.0, %v361
  %v363 = vpop.f32.mrb[0].mxu0
  %v364 = vadd.f32 0.0, %v363
  %v365 = vpop.f32.mrb[0].mxu0
  %v366 = vadd.f32 0.0, %v365
  %v367 = vpop.f32.mrb[0].mxu0
  %v368 = vadd.f32 0.0, %v367
  %369 = vdwg.mxu0
  %370 = vmatprep.subr.bf16.mxu0 %v216
  %371 = vmatpush1.bf16.msra.mxu0 %v215
  %372 = vmatprep.subr.bf16.mxu0 %v220
  %373 = vmatpush1.bf16.msra.mxu0 %v219
  %374 = vmatprep.subr.bf16.mxu0 %v224
  %375 = vmatpush1.bf16.msra.mxu0 %v223
  %376 = vmatprep.subr.bf16.mxu0 %v228
  %377 = vmatpush1.bf16.msra.mxu0 %v227
  %378 = vmatprep.subr.bf16.mxu0 %v232
  %379 = vmatpush1.bf16.msra.mxu0 %v231
  %380 = vmatprep.subr.bf16.mxu0 %v236
  %381 = vmatpush1.bf16.msra.mxu0 %v235
  %382 = vmatprep.subr.bf16.mxu0 %v240
  %383 = vmatpush1.bf16.msra.mxu0 %v239
  %384 = vmatprep.subr.bf16.mxu0 %v244
  %385 = vmatpush1.bf16.msra.mxu0 %v243
  %386 = vmatprep.subr.bf16.mxu0 0
  %387 = vmatpush1.bf16.msra.mxu0 0
  %388 = vmatprep.subr.bf16.mxu0 0
  %389 = vmatpush1.bf16.msra.mxu0 0
  %390 = vmatprep.subr.bf16.mxu0 0
  %391 = vmatpush1.bf16.msra.mxu0 0
  %392 = vmatprep.subr.bf16.mxu0 0
  %393 = vmatpush1.bf16.msra.mxu0 0
  %394 = vmatprep.subr.bf16.mxu0 0
  %395 = vmatpush1.bf16.msra.mxu0 0
  %396 = vmatprep.subr.bf16.mxu0 0
  %397 = vmatpush1.bf16.msra.mxu0 0
  %398 = vmatprep.subr.bf16.mxu0 0
  %399 = vmatpush1.bf16.msra.mxu0 0
  %400 = vmatprep.subr.bf16.mxu0 0
  %401 = vmatpush1.bf16.msra.mxu0 0
  %402 = vmatprep.mubr.bf16.mxu0 0
  %403 = vmatmul.mubr.bf16.gmra.mrb[0].mxu0 %v105
  %v404 = vpop.f32.mrb[0].mxu0
  %v405 = vadd.f32 0.0, %v404
  %v406 = vpop.f32.mrb[0].mxu0
  %v407 = vadd.f32 0.0, %v406
  %v408 = vpop.f32.mrb[0].mxu0
  %v409 = vadd.f32 0.0, %v408
  %v410 = vpop.f32.mrb[0].mxu0
  %v411 = vadd.f32 0.0, %v410
  %412 = vmatprep.mubr.bf16.mxu0 0
  %413 = vmatmul.mubr.bf16.gmra.mrb[0].mxu0 %v106
  %v414 = vpop.f32.mrb[0].mxu0
  %v415 = vadd.f32 0.0, %v414
  %v416 = vpop.f32.mrb[0].mxu0
  %v417 = vadd.f32 0.0, %v416
  %v418 = vpop.f32.mrb[0].mxu0
  %v419 = vadd.f32 0.0, %v418
  %v420 = vpop.f32.mrb[0].mxu0
  %v421 = vadd.f32 0.0, %v420
  %422 = vmatprep.mubr.bf16.mxu0 0
  %423 = vmatmul.mubr.bf16.gmra.mrb[0].mxu0 %v107
  %v424 = vpop.f32.mrb[0].mxu0
  %v425 = vadd.f32 0.0, %v424
  %v426 = vpop.f32.mrb[0].mxu0
  %v427 = vadd.f32 0.0, %v426
  %v428 = vpop.f32.mrb[0].mxu0
  %v429 = vadd.f32 0.0, %v428
  %v430 = vpop.f32.mrb[0].mxu0
  %v431 = vadd.f32 0.0, %v430
  %432 = vmatprep.mubr.bf16.mxu0 0
  %433 = vmatmul.mubr.bf16.gmra.mrb[0].mxu0 %v108
  %v434 = vpop.f32.mrb[0].mxu0
  %v435 = vadd.f32 0.0, %v434
  %v436 = vpop.f32.mrb[0].mxu0
  %v437 = vadd.f32 0.0, %v436
  %v438 = vpop.f32.mrb[0].mxu0
  %v439 = vadd.f32 0.0, %v438
  %v440 = vpop.f32.mrb[0].mxu0
  %v441 = vadd.f32 0.0, %v440
  %442 = vmatprep.mubr.bf16.mxu0 0
  %443 = vmatmul.mubr.bf16.gmra.mrb[0].mxu0 %v109
  %v444 = vpop.f32.mrb[0].mxu0
  %v445 = vadd.f32 0.0, %v444
  %v446 = vpop.f32.mrb[0].mxu0
  %v447 = vadd.f32 0.0, %v446
  %v448 = vpop.f32.mrb[0].mxu0
  %v449 = vadd.f32 0.0, %v448
  %v450 = vpop.f32.mrb[0].mxu0
  %v451 = vadd.f32 0.0, %v450
  %452 = vmatprep.mubr.bf16.mxu0 0
  %453 = vmatmul.mubr.bf16.gmra.mrb[0].mxu0 %v110
  %v454 = vpop.f32.mrb[0].mxu0
  %v455 = vadd.f32 0.0, %v454
  %v456 = vpop.f32.mrb[0].mxu0
  %v457 = vadd.f32 0.0, %v456
  %v458 = vpop.f32.mrb[0].mxu0
  %v459 = vadd.f32 0.0, %v458
  %v460 = vpop.f32.mrb[0].mxu0
  %v461 = vadd.f32 0.0, %v460
  %462 = vdwg.mxu0
  %v463 = vld [vmem:[%s3] sm:$0xff]
  %v464 = vld [vmem:[%s3 + $0x8] sm:$0xff]
  %v465 = vld [vmem:[%s3 + $0x10] sm:$0xff]
  %v466 = vld [vmem:[%s3 + $0x18] sm:$0xff]
  %v467 = vld [vmem:[%s3 + $0x20] sm:$0xff]
  %v468 = vld [vmem:[%s3 + $0x28] sm:$0xff]
  %v469 = vld [vmem:[%s3 + $0x30] sm:$0xff]
  %v470 = vld [vmem:[%s3 + $0x38] sm:$0xff]
  %v471 = vld [vmem:[%s3 + $0x40] sm:$0xff]
  %v472 = vld [vmem:[%s3 + $0x48] sm:$0xff]
  %v473 = vld [vmem:[%s3 + $0x50] sm:$0xff]
  %v474 = vld [vmem:[%s3 + $0x58] sm:$0xff]
  %v475 = vld [vmem:[%s4] sm:$0xff]
  %v476 = vld [vmem:[%s4 + $0x8] sm:$0xff]
  %v477 = vld [vmem:[%s4 + $0x10] sm:$0xff]
  %v478 = vld [vmem:[%s4 + $0x18] sm:$0xff]
  %v479 = vld [vmem:[%s4 + $0x20] sm:$0xff]
  %v480 = vld [vmem:[%s4 + $0x28] sm:$0xff]
  %v481 = vld [vmem:[%s4 + $0x30] sm:$0xff]
  %v482 = vld [vmem:[%s4 + $0x38] sm:$0xff]
  %v483 = vld [vmem:[%s4 + $0x40] sm:$0xff]
  %v484 = vld [vmem:[%s4 + $0x48] sm:$0xff]
  %v485 = vld [vmem:[%s4 + $0x50] sm:$0xff]
  %v486 = vld [vmem:[%s4 + $0x58] sm:$0xff]
  %488 = vset.pattern.permute.xlu0 0
  %489 = vperm.xlu0 %488, %v475
  %v490 = vpop.permute.xlu0 %489
  %493 = vset.pattern.permute.xlu0 0
  %494 = vperm.xlu0 %493, %v476
  %v495 = vpop.permute.xlu0 %494
  %498 = vset.pattern.permute.xlu0 0
  %499 = vperm.xlu0 %498, %v477
  %v500 = vpop.permute.xlu0 %499
  %503 = vset.pattern.permute.xlu0 0
  %504 = vperm.xlu0 %503, %v478
  %v505 = vpop.permute.xlu0 %504
  %508 = vset.pattern.permute.xlu0 0
  %509 = vperm.xlu0 %508, %v479
  %v510 = vpop.permute.xlu0 %509
  %513 = vset.pattern.permute.xlu0 0
  %514 = vperm.xlu0 %513, %v480
  %v515 = vpop.permute.xlu0 %514
  %518 = vset.pattern.permute.xlu0 0
  %519 = vperm.xlu0 %518, %v481
  %v520 = vpop.permute.xlu0 %519
  %523 = vset.pattern.permute.xlu0 0
  %524 = vperm.xlu0 %523, %v482
  %v525 = vpop.permute.xlu0 %524
  %528 = vset.pattern.permute.xlu0 0
  %529 = vperm.xlu0 %528, %v483
  %v530 = vpop.permute.xlu0 %529
  %533 = vset.pattern.permute.xlu0 0
  %534 = vperm.xlu0 %533, %v484
  %v535 = vpop.permute.xlu0 %534
  %538 = vset.pattern.permute.xlu0 0
  %539 = vperm.xlu0 %538, %v485
  %v540 = vpop.permute.xlu0 %539
  %543 = vset.pattern.permute.xlu0 0
  %544 = vperm.xlu0 %543, %v486
  %v545 = vpop.permute.xlu0 %544
  %vm547 = vcmask 261120
  %v549 = vsel %vm547, %v463, 0
  %v552 = vsel %vm547, %v464, 0
  %v555 = vsel %vm547, %v465, 0
  %v558 = vsel %vm547, %v466, 0
  %v561 = vsel %vm547, %v467, 0
  %v564 = vsel %vm547, %v468, 0
  %v567 = vsel %vm547, %v469, 0
  %v570 = vsel %vm547, %v470, 0
  %v573 = vsel %vm547, %v471, 0
  %v576 = vsel %vm547, %v472, 0
  %v579 = vsel %vm547, %v473, 0
  %v582 = vsel %vm547, %v474, 0
  %584 = vmatprep.subr.mxu0 %v22
  %585 = vmatpush1.msra.mxu0 %v21
  %586 = vmatprep.subr.mxu0 %v26
  %587 = vmatpush1.msra.mxu0 %v25
  %588 = vmatprep.subr.mxu0 %v30
  %589 = vmatpush1.msra.mxu0 %v29
  %590 = vmatprep.subr.mxu0 %v34
  %591 = vmatpush1.msra.mxu0 %v33
  %592 = vmatprep.subr.mxu0 0.0
  %593 = vmatpush1.msra.mxu0 0.0
  %594 = vmatprep.subr.mxu0 0.0
  %595 = vmatpush1.msra.mxu0 0.0
  %596 = vmatprep.subr.mxu0 0.0
  %597 = vmatpush1.msra.mxu0 0.0
  %598 = vmatprep.subr.mxu0 0.0
  %599 = vmatpush1.msra.mxu0 0.0
  %600 = vmatprep.subr.mxu0 0.0
  %601 = vmatpush1.msra.mxu0 0.0
  %602 = vmatprep.subr.mxu0 0.0
  %603 = vmatpush1.msra.mxu0 0.0
  %604 = vmatprep.subr.mxu0 0.0
  %605 = vmatpush1.msra.mxu0 0.0
  %606 = vmatprep.subr.mxu0 0.0
  %607 = vmatpush1.msra.mxu0 0.0
  %608 = vmatprep.subr.mxu0 0.0
  %609 = vmatpush1.msra.mxu0 0.0
  %610 = vmatprep.subr.mxu0 0.0
  %611 = vmatpush1.msra.mxu0 0.0
  %612 = vmatprep.subr.mxu0 0.0
  %613 = vmatpush1.msra.mxu0 0.0
  %614 = vmatprep.subr.mxu0 0.0
  %615 = vmatpush1.msra.mxu0 0.0
  %616 = vmatprep.subr.mxu0 0.0
  %617 = vmatpush1.msra.mxu0 0.0
  %618 = vmatprep.subr.mxu0 0.0
  %619 = vmatpush1.msra.mxu0 0.0
  %620 = vmatprep.subr.mxu0 0.0
  %621 = vmatpush1.msra.mxu0 0.0
  %622 = vmatprep.subr.mxu0 0.0
  %623 = vmatpush1.msra.mxu0 0.0
  %624 = vmatprep.subr.mxu0 0.0
  %625 = vmatpush1.msra.mxu0 0.0
  %626 = vmatprep.subr.mxu0 0.0
  %627 = vmatpush1.msra.mxu0 0.0
  %628 = vmatprep.subr.mxu0 0.0
  %629 = vmatpush1.msra.mxu0 0.0
  %630 = vmatprep.subr.mxu0 0.0
  %631 = vmatpush1.msra.mxu0 0.0
  %632 = vmatprep.subr.mxu0 0.0
  %633 = vmatpush1.msra.mxu0 0.0
  %634 = vmatprep.subr.mxu0 0.0
  %635 = vmatpush1.msra.mxu0 0.0
  %636 = vmatprep.subr.mxu0 0.0
  %637 = vmatpush1.msra.mxu0 0.0
  %638 = vmatprep.subr.mxu0 0.0
  %639 = vmatpush1.msra.mxu0 0.0
  %640 = vmatprep.subr.mxu0 0.0
  %641 = vmatpush1.msra.mxu0 0.0
  %642 = vmatprep.subr.mxu0 0.0
  %643 = vmatpush1.msra.mxu0 0.0
  %644 = vmatprep.subr.mxu0 0.0
  %645 = vmatpush1.msra.mxu0 0.0
  %646 = vmatprep.subr.mxu0 0.0
  %647 = vmatpush1.msra.mxu0 0.0
  %648 = vmatprep.mubr.f32.mxu0 0.0
  %649 = vmatmul.mubr.f32.gmra.mrb[0].mxu0 %v549
  %v650 = vpop.f32.mrb[0].mxu0
  %v651 = vadd.f32 %v490, %v650
  %v652 = vpop.f32.mrb[0].mxu0
  %v653 = vadd.f32 %v490, %v652
  %654 = vmatprep.mubr.f32.mxu0 0.0
  %655 = vmatmul.mubr.f32.gmra.mrb[0].mxu0 %v552
  %v656 = vpop.f32.mrb[0].mxu0
  %v657 = vadd.f32 %v495, %v656
  %v658 = vpop.f32.mrb[0].mxu0
  %v659 = vadd.f32 %v495, %v658
  %660 = vmatprep.mubr.f32.mxu0 0.0
  %661 = vmatmul.mubr.f32.gmra.mrb[0].mxu0 %v555
  %v662 = vpop.f32.mrb[0].mxu0
  %v663 = vadd.f32 %v500, %v662
  %v664 = vpop.f32.mrb[0].mxu0
  %v665 = vadd.f32 %v500, %v664
  %666 = vmatprep.mubr.f32.mxu0 0.0
  %667 = vmatmul.mubr.f32.gmra.mrb[0].mxu0 %v558
  %v668 = vpop.f32.mrb[0].mxu0
  %v669 = vadd.f32 %v505, %v668
  %v670 = vpop.f32.mrb[0].mxu0
  %v671 = vadd.f32 %v505, %v670
  %672 = vmatprep.mubr.f32.mxu0 0.0
  %673 = vmatmul.mubr.f32.gmra.mrb[0].mxu0 %v561
  %v674 = vpop.f32.mrb[0].mxu0
  %v675 = vadd.f32 %v510, %v674
  %v676 = vpop.f32.mrb[0].mxu0
  %v677 = vadd.f32 %v510, %v676
  %678 = vmatprep.mubr.f32.mxu0 0.0
  %679 = vmatmul.mubr.f32.gmra.mrb[0].mxu0 %v564
  %v680 = vpop.f32.mrb[0].mxu0
  %v681 = vadd.f32 %v515, %v680
  %v682 = vpop.f32.mrb[0].mxu0
  %v683 = vadd.f32 %v515, %v682
  %684 = vmatprep.mubr.f32.mxu0 0.0
  %685 = vmatmul.mubr.f32.gmra.mrb[0].mxu0 %v567
  %v686 = vpop.f32.mrb[0].mxu0
  %v687 = vadd.f32 %v520, %v686
  %v688 = vpop.f32.mrb[0].mxu0
  %v689 = vadd.f32 %v520, %v688
  %690 = vmatprep.mubr.f32.mxu0 0.0
  %691 = vmatmul.mubr.f32.gmra.mrb[0].mxu0 %v570
  %v692 = vpop.f32.mrb[0].mxu0
  %v693 = vadd.f32 %v525, %v692
  %v694 = vpop.f32.mrb[0].mxu0
  %v695 = vadd.f32 %v525, %v694
  %696 = vmatprep.mubr.f32.mxu0 0.0
  %697 = vmatmul.mubr.f32.gmra.mrb[0].mxu0 %v573
  %v698 = vpop.f32.mrb[0].mxu0
  %v699 = vadd.f32 %v530, %v698
  %v700 = vpop.f32.mrb[0].mxu0
  %v701 = vadd.f32 %v530, %v700
  %702 = vmatprep.mubr.f32.mxu0 0.0
  %703 = vmatmul.mubr.f32.gmra.mrb[0].mxu0 %v576
  %v704 = vpop.f32.mrb[0].mxu0
  %v705 = vadd.f32 %v535, %v704
  %v706 = vpop.f32.mrb[0].mxu0
  %v707 = vadd.f32 %v535, %v706
  %708 = vmatprep.mubr.f32.mxu0 0.0
  %709 = vmatmul.mubr.f32.gmra.mrb[0].mxu0 %v579
  %v710 = vpop.f32.mrb[0].mxu0
  %v711 = vadd.f32 %v540, %v710
  %v712 = vpop.f32.mrb[0].mxu0
  %v713 = vadd.f32 %v540, %v712
  %714 = vmatprep.mubr.f32.mxu0 0.0
  %715 = vmatmul.mubr.f32.gmra.mrb[0].mxu0 %v582
  %v716 = vpop.f32.mrb[0].mxu0
  %v717 = vadd.f32 %v545, %v716
  %v718 = vpop.f32.mrb[0].mxu0
  %v719 = vadd.f32 %v545, %v718
  %720 = vdwg.mxu0
  %721 = vmatprep.subr.mxu0 %v24
  %722 = vmatpush1.msra.mxu0 %v23
  %723 = vmatprep.subr.mxu0 %v28
  %724 = vmatpush1.msra.mxu0 %v27
  %725 = vmatprep.subr.mxu0 %v32
  %726 = vmatpush1.msra.mxu0 %v31
  %727 = vmatprep.subr.mxu0 %v36
  %728 = vmatpush1.msra.mxu0 %v35
  %729 = vmatprep.subr.mxu0 0.0
  %730 = vmatpush1.msra.mxu0 0.0
  %731 = vmatprep.subr.mxu0 0.0
  %732 = vmatpush1.msra.mxu0 0.0
  %733 = vmatprep.subr.mxu0 0.0
  %734 = vmatpush1.msra.mxu0 0.0
  %735 = vmatprep.subr.mxu0 0.0
  %736 = vmatpush1.msra.mxu0 0.0
  %737 = vmatprep.subr.mxu0 0.0
  %738 = vmatpush1.msra.mxu0 0.0
  %739 = vmatprep.subr.mxu0 0.0
  %740 = vmatpush1.msra.mxu0 0.0
  %741 = vmatprep.subr.mxu0 0.0
  %742 = vmatpush1.msra.mxu0 0.0
  %743 = vmatprep.subr.mxu0 0.0
  %744 = vmatpush1.msra.mxu0 0.0
  %745 = vmatprep.subr.mxu0 0.0
  %746 = vmatpush1.msra.mxu0 0.0
  %747 = vmatprep.subr.mxu0 0.0
  %748 = vmatpush1.msra.mxu0 0.0
  %749 = vmatprep.subr.mxu0 0.0
  %750 = vmatpush1.msra.mxu0 0.0
  %751 = vmatprep.subr.mxu0 0.0
  %752 = vmatpush1.msra.mxu0 0.0
  %753 = vmatprep.subr.mxu0 0.0
  %754 = vmatpush1.msra.mxu0 0.0
  %755 = vmatprep.subr.mxu0 0.0
  %756 = vmatpush1.msra.mxu0 0.0
  %757 = vmatprep.subr.mxu0 0.0
  %758 = vmatpush1.msra.mxu0 0.0
  %759 = vmatprep.subr.mxu0 0.0
  %760 = vmatpush1.msra.mxu0 0.0
  %761 = vmatprep.subr.mxu0 0.0
  %762 = vmatpush1.msra.mxu0 0.0
  %763 = vmatprep.subr.mxu0 0.0
  %764 = vmatpush1.msra.mxu0 0.0
  %765 = vmatprep.subr.mxu0 0.0
  %766 = vmatpush1.msra.mxu0 0.0
  %767 = vmatprep.subr.mxu0 0.0
  %768 = vmatpush1.msra.mxu0 0.0
  %769 = vmatprep.subr.mxu0 0.0
  %770 = vmatpush1.msra.mxu0 0.0
  %771 = vmatprep.subr.mxu0 0.0
  %772 = vmatpush1.msra.mxu0 0.0
  %773 = vmatprep.subr.mxu0 0.0
  %774 = vmatpush1.msra.mxu0 0.0
  %775 = vmatprep.subr.mxu0 0.0
  %776 = vmatpush1.msra.mxu0 0.0
  %777 = vmatprep.subr.mxu0 0.0
  %778 = vmatpush1.msra.mxu0 0.0
  %779 = vmatprep.subr.mxu0 0.0
  %780 = vmatpush1.msra.mxu0 0.0
  %781 = vmatprep.subr.mxu0 0.0
  %782 = vmatpush1.msra.mxu0 0.0
  %783 = vmatprep.subr.mxu0 0.0
  %784 = vmatpush1.msra.mxu0 0.0
  %785 = vmatprep.mubr.f32.mxu0 0.0
  %786 = vmatmul.mubr.f32.gmra.mrb[0].mxu0 %v549
  %v787 = vpop.f32.mrb[0].mxu0
  %v788 = vadd.f32 %v490, %v787
  %v789 = vpop.f32.mrb[0].mxu0
  %v790 = vadd.f32 %v490, %v789
  %791 = vmatprep.mubr.f32.mxu0 0.0
  %792 = vmatmul.mubr.f32.gmra.mrb[0].mxu0 %v552
  %v793 = vpop.f32.mrb[0].mxu0
  %v794 = vadd.f32 %v495, %v793
  %v795 = vpop.f32.mrb[0].mxu0
  %v796 = vadd.f32 %v495, %v795
  %797 = vmatprep.mubr.f32.mxu0 0.0
  %798 = vmatmul.mubr.f32.gmra.mrb[0].mxu0 %v555
  %v799 = vpop.f32.mrb[0].mxu0
  %v800 = vadd.f32 %v500, %v799
  %v801 = vpop.f32.mrb[0].mxu0
  %v802 = vadd.f32 %v500, %v801
  %803 = vmatprep.mubr.f32.mxu0 0.0
  %804 = vmatmul.mubr.f32.gmra.mrb[0].mxu0 %v558
  %v805 = vpop.f32.mrb[0].mxu0
  %v806 = vadd.f32 %v505, %v805
  %v807 = vpop.f32.mrb[0].mxu0
  %v808 = vadd.f32 %v505, %v807
  %809 = vmatprep.mubr.f32.mxu0 0.0
  %810 = vmatmul.mubr.f32.gmra.mrb[0].mxu0 %v561
  %v811 = vpop.f32.mrb[0].mxu0
  %v812 = vadd.f32 %v510, %v811
  %v813 = vpop.f32.mrb[0].mxu0
  %v814 = vadd.f32 %v510, %v813
  %815 = vmatprep.mubr.f32.mxu0 0.0
  %816 = vmatmul.mubr.f32.gmra.mrb[0].mxu0 %v564
  %v817 = vpop.f32.mrb[0].mxu0
  %v818 = vadd.f32 %v515, %v817
  %v819 = vpop.f32.mrb[0].mxu0
  %v820 = vadd.f32 %v515, %v819
  %821 = vmatprep.mubr.f32.mxu0 0.0
  %822 = vmatmul.mubr.f32.gmra.mrb[0].mxu0 %v567
  %v823 = vpop.f32.mrb[0].mxu0
  %v824 = vadd.f32 %v520, %v823
  %v825 = vpop.f32.mrb[0].mxu0
  %v826 = vadd.f32 %v520, %v825
  %827 = vmatprep.mubr.f32.mxu0 0.0
  %828 = vmatmul.mubr.f32.gmra.mrb[0].mxu0 %v570
  %v829 = vpop.f32.mrb[0].mxu0
  %v830 = vadd.f32 %v525, %v829
  %v831 = vpop.f32.mrb[0].mxu0
  %v832 = vadd.f32 %v525, %v831
  %833 = vmatprep.mubr.f32.mxu0 0.0
  %834 = vmatmul.mubr.f32.gmra.mrb[0].mxu0 %v573
  %v835 = vpop.f32.mrb[0].mxu0
  %v836 = vadd.f32 %v530, %v835
  %v837 = vpop.f32.mrb[0].mxu0
  %v838 = vadd.f32 %v530, %v837
  %839 = vmatprep.mubr.f32.mxu0 0.0
  %840 = vmatmul.mubr.f32.gmra.mrb[0].mxu0 %v576
  %v841 = vpop.f32.mrb[0].mxu0
  %v842 = vadd.f32 %v535, %v841
  %v843 = vpop.f32.mrb[0].mxu0
  %v844 = vadd.f32 %v535, %v843
  %845 = vmatprep.mubr.f32.mxu0 0.0
  %846 = vmatmul.mubr.f32.gmra.mrb[0].mxu0 %v579
  %v847 = vpop.f32.mrb[0].mxu0
  %v848 = vadd.f32 %v540, %v847
  %v849 = vpop.f32.mrb[0].mxu0
  %v850 = vadd.f32 %v540, %v849
  %851 = vmatprep.mubr.f32.mxu0 0.0
  %852 = vmatmul.mubr.f32.gmra.mrb[0].mxu0 %v582
  %v853 = vpop.f32.mrb[0].mxu0
  %v854 = vadd.f32 %v545, %v853
  %v855 = vpop.f32.mrb[0].mxu0
  %v856 = vadd.f32 %v545, %v855
  %857 = vdwg.mxu0
  %v858 = vadd.f32 %v312, %v651
  %v859 = vadd.f32 %v314, %v653
  %v860 = vadd.f32 %v405, %v788
  %v861 = vadd.f32 %v407, %v790
  %v862 = vadd.f32 %v316, %v657
  %v863 = vadd.f32 %v318, %v659
  %v864 = vadd.f32 %v409, %v794
  %v865 = vadd.f32 %v411, %v796
  %v866 = vadd.f32 %v322, %v663
  %v867 = vadd.f32 %v324, %v665
  %v868 = vadd.f32 %v415, %v800
  %v869 = vadd.f32 %v417, %v802
  %v870 = vadd.f32 %v326, %v669
  %v871 = vadd.f32 %v328, %v671
  %v872 = vadd.f32 %v419, %v806
  %v873 = vadd.f32 %v421, %v808
  %v874 = vxor.u32 %v858, 2147483648
  %v875 = vxor.u32 %v859, 2147483648
  %v876 = vxor.u32 %v860, 2147483648
  %v877 = vxor.u32 %v861, 2147483648
  %v878 = vxor.u32 %v862, 2147483648
  %v879 = vxor.u32 %v863, 2147483648
  %v880 = vxor.u32 %v864, 2147483648
  %v881 = vxor.u32 %v865, 2147483648
  %v882 = vxor.u32 %v866, 2147483648
  %v883 = vxor.u32 %v867, 2147483648
  %v884 = vxor.u32 %v868, 2147483648
  %v885 = vxor.u32 %v869, 2147483648
  %v886 = vxor.u32 %v870, 2147483648
  %v887 = vxor.u32 %v871, 2147483648
  %v888 = vxor.u32 %v872, 2147483648
  %v889 = vxor.u32 %v873, 2147483648
  %v890 = vmul.f32 %v874, 1.442695
  %v891 = vpow.pop %v890
  %v892 = vmul.f32 %v875, 1.442695
  %v893 = vpow.pop %v892
  %v894 = vmul.f32 %v876, 1.442695
  %v895 = vpow.pop %v894
  %v896 = vmul.f32 %v877, 1.442695
  %v897 = vpow.pop %v896
  %v898 = vmul.f32 %v878, 1.442695
  %v899 = vpow.pop %v898
  %v900 = vmul.f32 %v879, 1.442695
  %v901 = vpow.pop %v900
  %v902 = vmul.f32 %v880, 1.442695
  %v903 = vpow.pop %v902
  %v904 = vmul.f32 %v881, 1.442695
  %v905 = vpow.pop %v904
  %v906 = vmul.f32 %v882, 1.442695
  %v907 = vpow.pop %v906
  %v908 = vmul.f32 %v883, 1.442695
  %v909 = vpow.pop %v908
  %v910 = vmul.f32 %v884, 1.442695
  %v911 = vpow.pop %v910
  %v912 = vmul.f32 %v885, 1.442695
  %v913 = vpow.pop %v912
  %v914 = vmul.f32 %v886, 1.442695
  %v915 = vpow.pop %v914
  %v916 = vmul.f32 %v887, 1.442695
  %v917 = vpow.pop %v916
  %v918 = vmul.f32 %v888, 1.442695
  %v919 = vpow.pop %v918
  %v920 = vmul.f32 %v889, 1.442695
  %v921 = vpow.pop %v920
  %v922 = vadd.f32 %v891, 1.0
  %v923 = vadd.f32 %v893, 1.0
  %v924 = vadd.f32 %v895, 1.0
  %v925 = vadd.f32 %v897, 1.0
  %v926 = vadd.f32 %v899, 1.0
  %v927 = vadd.f32 %v901, 1.0
  %v928 = vadd.f32 %v903, 1.0
  %v929 = vadd.f32 %v905, 1.0
  %v930 = vadd.f32 %v907, 1.0
  %v931 = vadd.f32 %v909, 1.0
  %v932 = vadd.f32 %v911, 1.0
  %v933 = vadd.f32 %v913, 1.0
  %v934 = vadd.f32 %v915, 1.0
  %v935 = vadd.f32 %v917, 1.0
  %v936 = vadd.f32 %v919, 1.0
  %v937 = vadd.f32 %v921, 1.0
  %v938 = vrcp.pop %v922
  %v939 = vmul.f32 1.0, %v938
  %v940 = vrcp.pop %v923
  %v941 = vmul.f32 1.0, %v940
  %v942 = vrcp.pop %v924
  %v943 = vmul.f32 1.0, %v942
  %v944 = vrcp.pop %v925
  %v945 = vmul.f32 1.0, %v944
  %v946 = vrcp.pop %v926
  %v947 = vmul.f32 1.0, %v946
  %v948 = vrcp.pop %v927
  %v949 = vmul.f32 1.0, %v948
  %v950 = vrcp.pop %v928
  %v951 = vmul.f32 1.0, %v950
  %v952 = vrcp.pop %v929
  %v953 = vmul.f32 1.0, %v952
  %v954 = vrcp.pop %v930
  %v955 = vmul.f32 1.0, %v954
  %v956 = vrcp.pop %v931
  %v957 = vmul.f32 1.0, %v956
  %v958 = vrcp.pop %v932
  %v959 = vmul.f32 1.0, %v958
  %v960 = vrcp.pop %v933
  %v961 = vmul.f32 1.0, %v960
  %v962 = vrcp.pop %v934
  %v963 = vmul.f32 1.0, %v962
  %v964 = vrcp.pop %v935
  %v965 = vmul.f32 1.0, %v964
  %v966 = vrcp.pop %v936
  %v967 = vmul.f32 1.0, %v966
  %v968 = vrcp.pop %v937
  %v969 = vmul.f32 1.0, %v968
  %v970 = vadd.f32 %v332, %v675
  %v971 = vadd.f32 %v334, %v677
  %v972 = vadd.f32 %v425, %v812
  %v973 = vadd.f32 %v427, %v814
  %v974 = vadd.f32 %v336, %v681
  %v975 = vadd.f32 %v338, %v683
  %v976 = vadd.f32 %v429, %v818
  %v977 = vadd.f32 %v431, %v820
  %v978 = vadd.f32 %v342, %v687
  %v979 = vadd.f32 %v344, %v689
  %v980 = vadd.f32 %v435, %v824
  %v981 = vadd.f32 %v437, %v826
  %v982 = vadd.f32 %v346, %v693
  %v983 = vadd.f32 %v348, %v695
  %v984 = vadd.f32 %v439, %v830
  %v985 = vadd.f32 %v441, %v832
  %v986 = vxor.u32 %v970, 2147483648
  %v987 = vxor.u32 %v971, 2147483648
  %v988 = vxor.u32 %v972, 2147483648
  %v989 = vxor.u32 %v973, 2147483648
  %v990 = vxor.u32 %v974, 2147483648
  %v991 = vxor.u32 %v975, 2147483648
  %v992 = vxor.u32 %v976, 2147483648
  %v993 = vxor.u32 %v977, 2147483648
  %v994 = vxor.u32 %v978, 2147483648
  %v995 = vxor.u32 %v979, 2147483648
  %v996 = vxor.u32 %v980, 2147483648
  %v997 = vxor.u32 %v981, 2147483648
  %v998 = vxor.u32 %v982, 2147483648
  %v999 = vxor.u32 %v983, 2147483648
  %v1000 = vxor.u32 %v984, 2147483648
  %v1001 = vxor.u32 %v985, 2147483648
  %v1002 = vmul.f32 %v986, 1.442695
  %v1003 = vpow.pop %v1002
  %v1004 = vmul.f32 %v987, 1.442695
  %v1005 = vpow.pop %v1004
  %v1006 = vmul.f32 %v988, 1.442695
  %v1007 = vpow.pop %v1006
  %v1008 = vmul.f32 %v989, 1.442695
  %v1009 = vpow.pop %v1008
  %v1010 = vmul.f32 %v990, 1.442695
  %v1011 = vpow.pop %v1010
  %v1012 = vmul.f32 %v991, 1.442695
  %v1013 = vpow.pop %v1012
  %v1014 = vmul.f32 %v992, 1.442695
  %v1015 = vpow.pop %v1014
  %v1016 = vmul.f32 %v993, 1.442695
  %v1017 = vpow.pop %v1016
  %v1018 = vmul.f32 %v994, 1.442695
  %v1019 = vpow.pop %v1018
  %v1020 = vmul.f32 %v995, 1.442695
  %v1021 = vpow.pop %v1020
  %v1022 = vmul.f32 %v996, 1.442695
  %v1023 = vpow.pop %v1022
  %v1024 = vmul.f32 %v997, 1.442695
  %v1025 = vpow.pop %v1024
  %v1026 = vmul.f32 %v998, 1.442695
  %v1027 = vpow.pop %v1026
  %v1028 = vmul.f32 %v999, 1.442695
  %v1029 = vpow.pop %v1028
  %v1030 = vmul.f32 %v1000, 1.442695
  %v1031 = vpow.pop %v1030
  %v1032 = vmul.f32 %v1001, 1.442695
  %v1033 = vpow.pop %v1032
  %v1034 = vadd.f32 %v1003, 1.0
  %v1035 = vadd.f32 %v1005, 1.0
  %v1036 = vadd.f32 %v1007, 1.0
  %v1037 = vadd.f32 %v1009, 1.0
  %v1038 = vadd.f32 %v1011, 1.0
  %v1039 = vadd.f32 %v1013, 1.0
  %v1040 = vadd.f32 %v1015, 1.0
  %v1041 = vadd.f32 %v1017, 1.0
  %v1042 = vadd.f32 %v1019, 1.0
  %v1043 = vadd.f32 %v1021, 1.0
  %v1044 = vadd.f32 %v1023, 1.0
  %v1045 = vadd.f32 %v1025, 1.0
  %v1046 = vadd.f32 %v1027, 1.0
  %v1047 = vadd.f32 %v1029, 1.0
  %v1048 = vadd.f32 %v1031, 1.0
  %v1049 = vadd.f32 %v1033, 1.0
  %v1050 = vrcp.pop %v1034
  %v1051 = vmul.f32 1.0, %v1050
  %v1052 = vrcp.pop %v1035
  %v1053 = vmul.f32 1.0, %v1052
  %v1054 = vrcp.pop %v1036
  %v1055 = vmul.f32 1.0, %v1054
  %v1056 = vrcp.pop %v1037
  %v1057 = vmul.f32 1.0, %v1056
  %v1058 = vrcp.pop %v1038
  %v1059 = vmul.f32 1.0, %v1058
  %v1060 = vrcp.pop %v1039
  %v1061 = vmul.f32 1.0, %v1060
  %v1062 = vrcp.pop %v1040
  %v1063 = vmul.f32 1.0, %v1062
  %v1064 = vrcp.pop %v1041
  %v1065 = vmul.f32 1.0, %v1064
  %v1066 = vrcp.pop %v1042
  %v1067 = vmul.f32 1.0, %v1066
  %v1068 = vrcp.pop %v1043
  %v1069 = vmul.f32 1.0, %v1068
  %v1070 = vrcp.pop %v1044
  %v1071 = vmul.f32 1.0, %v1070
  %v1072 = vrcp.pop %v1045
  %v1073 = vmul.f32 1.0, %v1072
  %v1074 = vrcp.pop %v1046
  %v1075 = vmul.f32 1.0, %v1074
  %v1076 = vrcp.pop %v1047
  %v1077 = vmul.f32 1.0, %v1076
  %v1078 = vrcp.pop %v1048
  %v1079 = vmul.f32 1.0, %v1078
  %v1080 = vrcp.pop %v1049
  %v1081 = vmul.f32 1.0, %v1080
  %v1082 = vmul.f32 %v939, %v699
  %v1083 = vmul.f32 %v941, %v701
  %v1084 = vmul.f32 %v943, %v836
  %v1085 = vmul.f32 %v945, %v838
  %v1086 = vmul.f32 %v947, %v705
  %v1087 = vmul.f32 %v949, %v707
  %v1088 = vmul.f32 %v951, %v842
  %v1089 = vmul.f32 %v953, %v844
  %v1090 = vmul.f32 %v955, %v711
  %v1091 = vmul.f32 %v957, %v713
  %v1092 = vmul.f32 %v959, %v848
  %v1093 = vmul.f32 %v961, %v850
  %v1094 = vmul.f32 %v963, %v717
  %v1095 = vmul.f32 %v965, %v719
  %v1096 = vmul.f32 %v967, %v854
  %v1097 = vmul.f32 %v969, %v856
  %v1098 = vadd.f32 %v352, %v1082
  %v1099 = vadd.f32 %v354, %v1083
  %v1100 = vadd.f32 %v445, %v1084
  %v1101 = vadd.f32 %v447, %v1085
  %v1102 = vadd.f32 %v356, %v1086
  %v1103 = vadd.f32 %v358, %v1087
  %v1104 = vadd.f32 %v449, %v1088
  %v1105 = vadd.f32 %v451, %v1089
  %v1106 = vadd.f32 %v362, %v1090
  %v1107 = vadd.f32 %v364, %v1091
  %v1108 = vadd.f32 %v455, %v1092
  %v1109 = vadd.f32 %v457, %v1093
  %v1110 = vadd.f32 %v366, %v1094
  %v1111 = vadd.f32 %v368, %v1095
  %v1112 = vadd.f32 %v459, %v1096
  %v1113 = vadd.f32 %v461, %v1097
  %v1114 = vtanh.pop %v1098
  %v1115 = vtanh.pop %v1099
  %v1116 = vtanh.pop %v1100
  %v1117 = vtanh.pop %v1101
  %v1118 = vtanh.pop %v1102
  %v1119 = vtanh.pop %v1103
  %v1120 = vtanh.pop %v1104
  %v1121 = vtanh.pop %v1105
  %v1122 = vtanh.pop %v1106
  %v1123 = vtanh.pop %v1107
  %v1124 = vtanh.pop %v1108
  %v1125 = vtanh.pop %v1109
  %v1126 = vtanh.pop %v1110
  %v1127 = vtanh.pop %v1111
  %v1128 = vtanh.pop %v1112
  %v1129 = vtanh.pop %v1113
  %v1130 = vsub.f32 1.0, %v1051
  %v1131 = vsub.f32 1.0, %v1053
  %v1132 = vsub.f32 1.0, %v1055
  %v1133 = vsub.f32 1.0, %v1057
  %v1134 = vsub.f32 1.0, %v1059
  %v1135 = vsub.f32 1.0, %v1061
  %v1136 = vsub.f32 1.0, %v1063
  %v1137 = vsub.f32 1.0, %v1065
  %v1138 = vsub.f32 1.0, %v1067
  %v1139 = vsub.f32 1.0, %v1069
  %v1140 = vsub.f32 1.0, %v1071
  %v1141 = vsub.f32 1.0, %v1073
  %v1142 = vsub.f32 1.0, %v1075
  %v1143 = vsub.f32 1.0, %v1077
  %v1144 = vsub.f32 1.0, %v1079
  %v1145 = vsub.f32 1.0, %v1081
  %v1146 = vmul.f32 %v1130, %v1114
  %v1147 = vmul.f32 %v1131, %v1115
  %v1148 = vmul.f32 %v1132, %v1116
  %v1149 = vmul.f32 %v1133, %v1117
  %v1150 = vmul.f32 %v1134, %v1118
  %v1151 = vmul.f32 %v1135, %v1119
  %v1152 = vmul.f32 %v1136, %v1120
  %v1153 = vmul.f32 %v1137, %v1121
  %v1154 = vmul.f32 %v1138, %v1122
  %v1155 = vmul.f32 %v1139, %v1123
  %v1156 = vmul.f32 %v1140, %v1124
  %v1157 = vmul.f32 %v1141, %v1125
  %v1158 = vmul.f32 %v1142, %v1126
  %v1159 = vmul.f32 %v1143, %v1127
  %v1160 = vmul.f32 %v1144, %v1128
  %v1161 = vmul.f32 %v1145, %v1129
  %v1162 = vmul.f32 %v1051, %v21
  %v1163 = vmul.f32 %v1053, %v22
  %v1164 = vmul.f32 %v1055, %v23
  %v1165 = vmul.f32 %v1057, %v24
  %v1166 = vmul.f32 %v1059, %v25
  %v1167 = vmul.f32 %v1061, %v26
  %v1168 = vmul.f32 %v1063, %v27
  %v1169 = vmul.f32 %v1065, %v28
  %v1170 = vmul.f32 %v1067, %v29
  %v1171 = vmul.f32 %v1069, %v30
  %v1172 = vmul.f32 %v1071, %v31
  %v1173 = vmul.f32 %v1073, %v32
  %v1174 = vmul.f32 %v1075, %v33
  %v1175 = vmul.f32 %v1077, %v34
  %v1176 = vmul.f32 %v1079, %v35
  %v1177 = vmul.f32 %v1081, %v36
  %v1178 = vadd.f32 %v1146, %v1162
  %v1179 = vadd.f32 %v1147, %v1163
  %v1180 = vadd.f32 %v1148, %v1164
  %v1181 = vadd.f32 %v1149, %v1165
  %v1182 = vadd.f32 %v1150, %v1166
  %v1183 = vadd.f32 %v1151, %v1167
  %v1184 = vadd.f32 %v1152, %v1168
  %v1185 = vadd.f32 %v1153, %v1169
  %v1186 = vadd.f32 %v1154, %v1170
  %v1187 = vadd.f32 %v1155, %v1171
  %v1188 = vadd.f32 %v1156, %v1172
  %v1189 = vadd.f32 %v1157, %v1173
  %v1190 = vadd.f32 %v1158, %v1174
  %v1191 = vadd.f32 %v1159, %v1175
  %v1192 = vadd.f32 %v1160, %v1176
  %v1193 = vadd.f32 %v1161, %v1177
  %1194 = vst [vmem:[%s5] sm:$0xff] %v1178
  %1195 = vst [vmem:[%s5 + $0x8] sm:$0xff] %v1179
  %1196 = vst [vmem:[%s5 + $0x10] sm:$0xff] %v1180
  %1197 = vst [vmem:[%s5 + $0x18] sm:$0xff] %v1181
  %1198 = vst [vmem:[%s5 + $0x20] sm:$0xff] %v1182
  %1199 = vst [vmem:[%s5 + $0x28] sm:$0xff] %v1183
  %1200 = vst [vmem:[%s5 + $0x30] sm:$0xff] %v1184
  %1201 = vst [vmem:[%s5 + $0x38] sm:$0xff] %v1185
  %1202 = vst [vmem:[%s5 + $0x40] sm:$0xff] %v1186
  %1203 = vst [vmem:[%s5 + $0x48] sm:$0xff] %v1187
  %1204 = vst [vmem:[%s5 + $0x50] sm:$0xff] %v1188
  %1205 = vst [vmem:[%s5 + $0x58] sm:$0xff] %v1189
  %1206 = vst [vmem:[%s5 + $0x60] sm:$0xff] %v1190
  %1207 = vst [vmem:[%s5 + $0x68] sm:$0xff] %v1191
  %1208 = vst [vmem:[%s5 + $0x70] sm:$0xff] %v1192
  %1209 = vst [vmem:[%s5 + $0x78] sm:$0xff] %v1193
  // Predicated region
  $region22: #{dyrep_memory_forward.1} parent=0 // pred_check
    _
  $region23: #{dyrep_memory_forward.1} parent=0 // pred_check_branch
    %1211 = sbr.rel (0) target = $region25
  $region24: #{dyrep_memory_forward.1} parent=0 // pred_region
    _
  $region25: #{dyrep_memory_forward.1} parent=0 // pred_fallthru
    _
  // Predicated region
  $region26: #{dyrep_memory_forward.1} parent=0 // pred_check
    _
  $region27: #{dyrep_memory_forward.1} parent=0 // pred_check_branch
    %1213 = sbr.rel (0) target = $region29
  $region28: #{dyrep_memory_forward.1} parent=0 // pred_region
    _
  $region29: #{dyrep_memory_forward.1} parent=0 // pred_fallthru
    _

</llo_original>
